<compile_context>
chip_gen: v7x
topology: tpu7x:2x2x1
jax: 0.10.0
libtpu: 0.0.40
codegen_flags: <defaults>
</compile_context>

<pallas_src>
import functools

import jax
import jax.numpy as jnp
from jax.experimental import pallas as pl
from jax.experimental.pallas import tpu as pltpu

EPS = 1e-5
NEG_SLOPE = 0.01
LANE = 128
ROW = 16  # row-tile granularity (bf16 sublane packing = 16 rows)


def _round_up(x, m):
    return (x + m - 1) // m * m


def _leaky(v):
    return jnp.where(v >= 0.0, v, NEG_SLOPE * v)


def _device_settings():
    """(tb_max, vmem_limit_bytes), generation-aware."""
    kind = ""
    try:
        kind = jax.devices()[0].device_kind.lower()
    except Exception:
        pass
    if ("v5" in kind) or ("v6" in kind):
        # 128 MiB physical VMEM: larger tiles + higher scoped-VMEM limit.
        return 512, 96 * 1024 * 1024
    # Conservative default (v7x has only 64 MiB VMEM).
    return 256, 48 * 1024 * 1024


def _pick_feature_tiles(k_dim, f_pad, n_batch_tiles):
    """Number of output-feature grid tiles for a (k_dim, f_pad) bf16 weight.

    Splits the weight when (a) the VMEM-resident slab would be large (v7x has
    only 64 MiB VMEM) or (b) there is a single batch tile, so a second parallel
    grid axis is needed to keep both v7x TensorCores busy.
    """
    max_slab_bytes = 16 * 1024 * 1024
    nf = 1
    while True:
        tn = f_pad // nf
        can_halve = (tn % 2 == 0) and ((tn // 2) % LANE == 0)
        need = (k_dim * tn * 2 > max_slab_bytes) or (n_batch_tiles == 1 and nf < 2)
        if can_halve and need:
            nf *= 2
        else:
            return nf


def _weight_spec(shape, index_map, *, resident, nbytes):
    """BlockSpec for a weight slab; single-buffer large resident slabs."""
    if resident and nbytes > (4 << 20):
        try:
            # Constant-index block never changes across grid steps; one buffer
            # halves its VMEM footprint (matters on v7x's 64 MiB VMEM).
            return pl.BlockSpec(shape, index_map, pipeline_mode=pl.Buffered(1))
        except TypeError:  # pipeline_mode not supported in this JAX version
            pass
    return pl.BlockSpec(shape, index_map)


# --------------------------- in-kernel helpers ----------------------------------
def _tile_stats(v, sum_ref, m2_ref, *, tb, last_count):
    """Per-tile (sum, M2-about-tile-mean) partial BN statistics in f32.

    Centered partials avoid E[x^2]-mean^2 cancellation.  Masking is only
    emitted when the batch is ragged, and only the last tile executes it.
    """
    s = jnp.sum(v, axis=0, keepdims=True)
    d = v - s * (1.0 / tb)
    sum_ref[0] = s
    m2_ref[0] = jnp.sum(d * d, axis=0, keepdims=True)

    if last_count != tb:  # static: batch does not divide evenly into row tiles
        @pl.when(pl.program_id(0) == pl.num_programs(0) - 1)
        def _():
            mask = jax.lax.broadcasted_iota(jnp.int32, (tb, 1), 0) < last_count
            vm = jnp.where(mask, v, 0.0)
            sm = jnp.sum(vm, axis=0, keepdims=True)
            dm = jnp.where(mask, v - sm * (1.0 / last_count), 0.0)
            sum_ref[0] = sm
            m2_ref[0] = jnp.sum(dm * dm, axis=0, keepdims=True)


# ---------------- Kernel 1: Linear (bf16 MXU) + partial BN stats ----------------
def _linear_stats_kernel(x_ref, w_ref, h_ref, sum_ref, m2_ref, *, tb, last_count):
    h = jnp.dot(x_ref[...], w_ref[...], preferred_element_type=jnp.float32)
    h_bf = h.astype(jnp.bfloat16)
    h_ref[...] = h_bf                      # bf16 HBM store: halves K1/K2 traffic
    _tile_stats(h_bf.astype(jnp.float32), sum_ref, m2_ref,
                tb=tb, last_count=last_count)


# ------- Kernel 2: BN (folded scale/shift) + LeakyReLU + Linear + stats ---------
def _bn_act_linear_stats_kernel(h_ref, scale_ref, shift_ref, w_ref,
                                y_ref, sum_ref, m2_ref, *, tb, last_count):
    h = h_ref[...].astype(jnp.float32) * scale_ref[...] + shift_ref[...]
    h = _leaky(h)
    y = jnp.dot(h.astype(jnp.bfloat16), w_ref[...],
                preferred_element_type=jnp.float32)
    y_bf = y.astype(jnp.bfloat16)
    y_ref[...] = y_bf
    _tile_stats(y_bf.astype(jnp.float32), sum_ref, m2_ref,
                tb=tb, last_count=last_count)


# ---------------- Kernel 3: BN (folded scale/shift) + LeakyReLU -----------------
def _bn_act_kernel(y_ref, scale_ref, shift_ref, o_ref):
    y = y_ref[...].astype(jnp.float32) * scale_ref[...] + shift_ref[...]
    o_ref[...] = _leaky(y).astype(o_ref.dtype)


def _fold_bn(sums, m2s, counts, n_valid, gamma, beta):
    """Merge per-tile (count, sum, M2) partials (Chan) -> folded (scale, shift)."""
    mean = jnp.sum(sums, axis=0) / n_valid                 # (1, F)
    tile_mean = sums / counts                              # (T, 1, F)
    delta = tile_mean - mean
    m2 = jnp.sum(m2s + counts * delta * delta, axis=0)     # (1, F)
    var = m2 / n_valid                                     # biased (training BN)
    scale = gamma * jax.lax.rsqrt(var + EPS)
    shift = beta - mean * scale
    return scale, shift


def prep_params(params):
    """One-time weight padding + bf16 cast (hoisted out of the per-call forward).

    Linear biases are dropped on purpose: training-mode BatchNorm subtracts the
    batch mean, so per-feature constant biases cancel exactly.
    """
    d_in, H = params["w1"].shape
    O = params["w2"].shape[1]
    d_in_p, Hp, Op = _round_up(d_in, LANE), _round_up(H, LANE), _round_up(O, LANE)
    w1 = jnp.zeros((d_in_p, Hp), jnp.bfloat16).at[:d_in, :H].set(
        params["w1"].astype(jnp.bfloat16))
    w2 = jnp.zeros((Hp, Op), jnp.bfloat16).at[:H, :O].set(
        params["w2"].astype(jnp.bfloat16))
    pad_f = lambda p, F: jnp.zeros((1, F), jnp.float32).at[:, :p.shape[1]].set(p)
    return {
        "w1": w1, "w2": w2,
        "g1": pad_f(params["g1"], Hp), "be1": pad_f(params["be1"], Hp),
        "g2": pad_f(params["g2"], Op), "be2": pad_f(params["be2"], Op),
    }


def mlp_forward(x, prepped, *, oup_dim):
    """x: [B, inp_dim] float32. prepped: output of prep_params."""
    B, d_in = x.shape
    w1, w2 = prepped["w1"], prepped["w2"]
    d_in_p, Hp = w1.shape
    Op = w2.shape[1]

    tb_max, vmem_limit = _device_settings()

    # Balanced batch tiling: minimizes padded rows (at most one ragged tile).
    n_tiles = max(1, pl.cdiv(B, tb_max))
    tb = _round_up(pl.cdiv(B, n_tiles), ROW)
    Bp = n_tiles * tb
    last_count = B - (n_tiles - 1) * tb
    assert 0 < last_count <= tb  # only the last tile may contain padding

    # Feature tiling: bounds the VMEM-resident weight slab + gives >=2 parallel
    # grid steps (v7x megacore) when there is a single batch tile.
    nf1 = _pick_feature_tiles(d_in_p, Hp, n_tiles)
    nf2 = _pick_feature_tiles(Hp, Op, n_tiles)
    tn1, tn2 = Hp // nf1, Op // nf2

    # Pad + cast the input once (skipped when already padded bf16).
    if x.shape == (Bp, d_in_p) and x.dtype == jnp.bfloat16:
        x_p = x
    else:
        x_p = jnp.zeros((Bp, d_in_p), jnp.bfloat16).at[:B, :d_in].set(
            x.astype(jnp.bfloat16))

    counts = jnp.full((n_tiles, 1, 1), tb, jnp.float32).at[-1, 0, 0].set(
        float(last_count))
    nB = jnp.float32(B)

    cparams2d = pltpu.CompilerParams(
        dimension_semantics=("parallel", "parallel"),
        vmem_limit_bytes=vmem_limit,
    )
    cparams1d = pltpu.CompilerParams(
        dimension_semantics=("parallel",),
        vmem_limit_bytes=vmem_limit,
    )

    # ---- Pass 1: h = x @ w1 (bf16 out), centered partial stats of h -----------
    h, s1, m1 = pl.pallas_call(
        functools.partial(_linear_stats_kernel, tb=tb, last_count=last_count),
        grid=(n_tiles, nf1),
        in_specs=[
            pl.BlockSpec((tb, d_in_p), lambda i, j: (i, 0)),
            _weight_spec((d_in_p, tn1), lambda i, j: (0, j),
                         resident=(nf1 == 1), nbytes=d_in_p * tn1 * 2),
        ],
        out_specs=(
            pl.BlockSpec((tb, tn1), lambda i, j: (i, j)),
            pl.BlockSpec((1, 1, tn1), lambda i, j: (i, 0, j)),
            pl.BlockSpec((1, 1, tn1), lambda i, j: (i, 0, j)),
        ),
        out_shape=(
            jax.ShapeDtypeStruct((Bp, Hp), jnp.bfloat16),
            jax.ShapeDtypeStruct((n_tiles, 1, Hp), jnp.float32),
            jax.ShapeDtypeStruct((n_tiles, 1, Hp), jnp.float32),
        ),
        compiler_params=cparams2d,
    )(x_p, w1)

    scale1, shift1 = _fold_bn(s1, m1, counts, nB, prepped["g1"], prepped["be1"])

    # ---- Pass 2: BN + LeakyReLU + y = h' @ w2 (bf16 out), partial stats -------
    y, s2, m2 = pl.pallas_call(
        functools.partial(_bn_act_linear_stats_kernel, tb=tb,
                          last_count=last_count),
        grid=(n_tiles, nf2),
        in_specs=[
            pl.BlockSpec((tb, Hp), lambda i, j: (i, 0)),
            pl.BlockSpec((1, Hp), lambda i, j: (0, 0)),
            pl.BlockSpec((1, Hp), lambda i, j: (0, 0)),
            _weight_spec((Hp, tn2), lambda i, j: (0, j),
                         resident=(nf2 == 1), nbytes=Hp * tn2 * 2),
        ],
        out_specs=(
            pl.BlockSpec((tb, tn2), lambda i, j: (i, j)),
            pl.BlockSpec((1, 1, tn2), lambda i, j: (i, 0, j)),
            pl.BlockSpec((1, 1, tn2), lambda i, j: (i, 0, j)),
        ),
        out_shape=(
            jax.ShapeDtypeStruct((Bp, Op), jnp.bfloat16),
            jax.ShapeDtypeStruct((n_tiles, 1, Op), jnp.float32),
            jax.ShapeDtypeStruct((n_tiles, 1, Op), jnp.float32),
        ),
        compiler_params=cparams2d,
    )(h, scale1, shift1, w2)

    scale2, shift2 = _fold_bn(s2, m2, counts, nB, prepped["g2"], prepped["be2"])

    # ---- Pass 3: BN + LeakyReLU (elementwise, HBM-bound) -> larger row tile ----
    tb3, n_tiles3 = tb, n_tiles
    while n_tiles3 % 2 == 0 and tb3 * 2 <= 1024 and n_tiles3 // 2 >= 2:
        tb3, n_tiles3 = tb3 * 2, n_tiles3 // 2

    out = pl.pallas_call(
        _bn_act_kernel,
        grid=(n_tiles3,),
        in_specs=[
            pl.BlockSpec((tb3, Op), lambda i: (i, 0)),
            pl.BlockSpec((1, Op), lambda i: (0, 0)),
            pl.BlockSpec((1, Op), lambda i: (0, 0)),
        ],
        out_specs=pl.BlockSpec((tb3, Op), lambda i: (i, 0)),
        # Final output kept f32 to match the PyTorch module's dtype.
        # TODO(synk): emit bf16 + input_output_aliases={0: 0} if the consumer
        # tolerates a bf16 result (halves K3's HBM write traffic).
        out_shape=jax.ShapeDtypeStruct((Bp, Op), jnp.float32),
        compiler_params=cparams1d,
    )(y, scale2, shift2)

    return out[:B, :oup_dim]


def init_params(key, inp_dim, hidden, oup_dim):
    """Synthetic parameters matching nn.Linear / nn.BatchNorm1d.

    Linear weights stored transposed ([in, out]). Linear biases are kept (used
    by the f32 reference) but the kernel skips them: training-mode BatchNorm
    subtracts the batch mean, so they cancel exactly.
    """
    k1, k2, k3, k4 = jax.random.split(key, 4)
    bound1 = 1.0 / jnp.sqrt(inp_dim)
    bound2 = 1.0 / jnp.sqrt(hidden)
    return {
        "w1": jax.random.uniform(k1, (inp_dim, hidden), jnp.float32, -bound1, bound1),
        "b1": jax.random.uniform(k2, (1, hidden), jnp.float32, -bound1, bound1),
        "g1": jnp.ones((1, hidden), jnp.float32),
        "be1": jnp.zeros((1, hidden), jnp.float32),
        "w2": jax.random.uniform(k3, (hidden, oup_dim), jnp.float32, -bound2, bound2),
        "b2": jax.random.uniform(k4, (1, oup_dim), jnp.float32, -bound2, bound2),
        "g2": jnp.ones((1, oup_dim), jnp.float32),
        "be2": jnp.zeros((1, oup_dim), jnp.float32),
    }


def _reference(x, p):
    """Pure-JAX f32 reference (includes the Linear biases, like PyTorch)."""
    h = x @ p["w1"] + p["b1"]
    m = h.mean(0, keepdims=True)
    v = ((h - m) ** 2).mean(0, keepdims=True)
    h = (h - m) / jnp.sqrt(v + EPS) * p["g1"] + p["be1"]
    h = jnp.where(h >= 0, h, NEG_SLOPE * h)
    y = h @ p["w2"] + p["b2"]
    m = y.mean(0, keepdims=True)
    v = ((y - m) ** 2).mean(0, keepdims=True)
    y = (y - m) / jnp.sqrt(v + EPS) * p["g2"] + p["be2"]
    return jnp.where(y >= 0, y, NEG_SLOPE * y)


if __name__ == "__main__":
    B, inp_dim, hidden, oup_dim = 8, 16, 32, 16

    key = jax.random.PRNGKey(0)
    kx, kp = jax.random.split(key)
    x = jax.random.normal(kx, (B, inp_dim), jnp.float32)
    params = init_params(kp, inp_dim, hidden, oup_dim)

    prepped = prep_params(params)                 # one-time weight pad + bf16 cast
    fwd = jax.jit(functools.partial(mlp_forward, oup_dim=oup_dim))
    out = fwd(x, prepped)
    jax.block_until_ready(out)

    ref = _reference(x, params)
    assert out.shape == (B, oup_dim)
    # Tolerance accounts for bf16 MXU matmuls AND bf16 inter-pass activations
    # (accumulation and BN statistics stay f32 inside the kernels).
    err = float(jnp.max(jnp.abs(out - ref)))
    assert jnp.allclose(out, ref, atol=5e-2, rtol=5e-2), err

    print("KERNEL_OK")
</pallas_src>

<mosaic_0001>
module attributes {stable_mosaic.version = 11 : i64} {
  func.func @_linear_stats_kernel(%arg0: i32, %arg1: i32, %arg2: memref<16x128xbf16, #tpu.memory_space<vmem>>, %arg3: memref<128x128xbf16, #tpu.memory_space<vmem>>, %arg4: memref<16x128xbf16, #tpu.memory_space<vmem>>, %arg5: memref<1x1x128xf32, #tpu.memory_space<vmem>>, %arg6: memref<1x1x128xf32, #tpu.memory_space<vmem>>) attributes {dimension_semantics = [#tpu.dimension_semantics<parallel>, #tpu.dimension_semantics<parallel>], iteration_bounds = array<i64: 1, 1>, scalar_prefetch = 0 : i64, scratch_operands = 0 : i64, tpu.core_type = #tpu.core_type<tc>, window_params = [{transform_indices = @transform_0, window_bounds = array<i64: 16, 128>}, {transform_indices = @transform_1, window_bounds = array<i64: 128, 128>}, {transform_indices = @transform_2, window_bounds = array<i64: 16, 128>}, {transform_indices = @transform_3, window_bounds = array<i64: 1, 1, 128>}, {transform_indices = @transform_4, window_bounds = array<i64: 1, 1, 128>}]} {
    %c0 = arith.constant 0 : index
    %c0_0 = arith.constant 0 : index
    %0 = vector.load %arg2[%c0, %c0_0] : memref<16x128xbf16, #tpu.memory_space<vmem>>, vector<16x128xbf16>
    %c0_1 = arith.constant 0 : index
    %c0_2 = arith.constant 0 : index
    %1 = vector.load %arg3[%c0_1, %c0_2] : memref<128x128xbf16, #tpu.memory_space<vmem>>, vector<128x128xbf16>
    %cst = arith.constant dense<0.000000e+00> : vector<16x128xf32>
    %2 = tpu.matmul %0, %1, %cst {dimension_numbers = #tpu.dot_dimension_numbers<[1], [0], [0], [1], [0, 0, 1, 1], [], []>} : vector<16x128xbf16>, vector<128x128xbf16>, vector<16x128xf32> -> vector<16x128xf32>
    %3 = arith.truncf %2 : vector<16x128xf32> to vector<16x128xbf16>
    %c0_3 = arith.constant 0 : index
    %c0_4 = arith.constant 0 : index
    %4 = vector.load %arg4[%c0_3, %c0_4] : memref<16x128xbf16, #tpu.memory_space<vmem>>, vector<16x128xbf16>
    tpu.vector_store %arg4[%c0_3, %c0_4], %3 {strides = array<i32>} : memref<16x128xbf16, #tpu.memory_space<vmem>>, vector<16x128xbf16>,
    %5 = arith.extf %3 : vector<16x128xbf16> to vector<16x128xf32>
    %cst_5 = arith.constant dense<0.000000e+00> : vector<128xf32>
    %6 = vector.multi_reduction <add>, %5, %cst_5 [0] : vector<16x128xf32> to vector<128xf32>
    %7 = vector.shape_cast %6 : vector<128xf32> to vector<1x128xf32>
    %cst_6 = arith.constant 6.250000e-02 : f32
    %8 = vector.broadcast %cst_6 : f32 to vector<1x128xf32>
    %9 = arith.mulf %7, %8 : vector<1x128xf32>
    %10 = vector.broadcast %9 : vector<1x128xf32> to vector<16x128xf32>
    %11 = arith.subf %5, %10 : vector<16x128xf32>
    %c0_7 = arith.constant 0 : index
    %c0_8 = arith.constant 0 : index
    %c0_9 = arith.constant 0 : index
    %12 = vector.load %arg5[%c0_7, %c0_8, %c0_9] : memref<1x1x128xf32, #tpu.memory_space<vmem>>, vector<1x1x128xf32>
    %13 = vector.shape_cast %12 : vector<1x1x128xf32> to vector<1x128xf32>
    %14 = vector.shape_cast %7 : vector<1x128xf32> to vector<1x1x128xf32>
    tpu.vector_store %arg5[%c0_7, %c0_8, %c0_9], %14 {strides = array<i32>} : memref<1x1x128xf32, #tpu.memory_space<vmem>>, vector<1x1x128xf32>,
    %15 = arith.mulf %11, %11 : vector<16x128xf32>
    %cst_10 = arith.constant dense<0.000000e+00> : vector<128xf32>
    %16 = vector.multi_reduction <add>, %15, %cst_10 [0] : vector<16x128xf32> to vector<128xf32>
    %17 = vector.shape_cast %16 : vector<128xf32> to vector<1x128xf32>
    %c0_11 = arith.constant 0 : index
    %c0_12 = arith.constant 0 : index
    %c0_13 = arith.constant 0 : index
    %18 = vector.load %arg6[%c0_11, %c0_12, %c0_13] : memref<1x1x128xf32, #tpu.memory_space<vmem>>, vector<1x1x128xf32>
    %19 = vector.shape_cast %18 : vector<1x1x128xf32> to vector<1x128xf32>
    %20 = vector.shape_cast %17 : vector<1x128xf32> to vector<1x1x128xf32>
    tpu.vector_store %arg6[%c0_11, %c0_12, %c0_13], %20 {strides = array<i32>} : memref<1x1x128xf32, #tpu.memory_space<vmem>>, vector<1x1x128xf32>,
    %c0_i32 = arith.constant 0 : i32
    %21 = arith.cmpi eq, %arg0, %c0_i32 : i32
    %22 = arith.extui %21 : i1 to i32
    %c0_i32_14 = arith.constant 0 : i32
    %23 = arith.cmpi ne, %22, %c0_i32_14 : i32
    scf.if %23 {
      %24 = tpu.iota {dimensions = array<i32: 0>} : vector<16x1xi32>
      %c8_i32 = arith.constant 8 : i32
      %25 = vector.broadcast %c8_i32 : i32 to vector<16x1xi32>
      %26 = arith.cmpi slt, %24, %25 : vector<16x1xi32>
      %cst_15 = arith.constant 0.000000e+00 : f32
      %27 = vector.shape_cast %26 : vector<16x1xi1> to vector<16x1xi1>
      %28 = vector.broadcast %27 : vector<16x1xi1> to vector<16x128xi1>
      %29 = vector.broadcast %cst_15 : f32 to vector<16x128xf32>
      %30 = arith.select %28, %5, %29 : vector<16x128xi1>, vector<16x128xf32>
      %cst_16 = arith.constant dense<0.000000e+00> : vector<128xf32>
      %31 = vector.multi_reduction <add>, %30, %cst_16 [0] : vector<16x128xf32> to vector<128xf32>
      %32 = vector.shape_cast %31 : vector<128xf32> to vector<1x128xf32>
      %cst_17 = arith.constant 1.250000e-01 : f32
      %33 = vector.broadcast %cst_17 : f32 to vector<1x128xf32>
      %34 = arith.mulf %32, %33 : vector<1x128xf32>
      %35 = vector.broadcast %34 : vector<1x128xf32> to vector<16x128xf32>
      %36 = arith.subf %5, %35 : vector<16x128xf32>
      %cst_18 = arith.constant 0.000000e+00 : f32
      %37 = vector.shape_cast %26 : vector<16x1xi1> to vector<16x1xi1>
      %38 = vector.broadcast %37 : vector<16x1xi1> to vector<16x128xi1>
      %39 = vector.broadcast %cst_18 : f32 to vector<16x128xf32>
      %40 = arith.select %38, %36, %39 : vector<16x128xi1>, vector<16x128xf32>
      %c0_19 = arith.constant 0 : index
      %c0_20 = arith.constant 0 : index
      %c0_21 = arith.constant 0 : index
      %41 = vector.load %arg5[%c0_19, %c0_20, %c0_21] : memref<1x1x128xf32, #tpu.memory_space<vmem>>, vector<1x1x128xf32>
      %42 = vector.shape_cast %41 : vector<1x1x128xf32> to vector<1x128xf32>
      %43 = vector.shape_cast %32 : vector<1x128xf32> to vector<1x1x128xf32>
      tpu.vector_store %arg5[%c0_19, %c0_20, %c0_21], %43 {strides = array<i32>} : memref<1x1x128xf32, #tpu.memory_space<vmem>>, vector<1x1x128xf32>,
      %44 = arith.mulf %40, %40 : vector<16x128xf32>
      %cst_22 = arith.constant dense<0.000000e+00> : vector<128xf32>
      %45 = vector.multi_reduction <add>, %44, %cst_22 [0] : vector<16x128xf32> to vector<128xf32>
      %46 = vector.shape_cast %45 : vector<128xf32> to vector<1x128xf32>
      %c0_23 = arith.constant 0 : index
      %c0_24 = arith.constant 0 : index
      %c0_25 = arith.constant 0 : index
      %47 = vector.load %arg6[%c0_23, %c0_24, %c0_25] : memref<1x1x128xf32, #tpu.memory_space<vmem>>, vector<1x1x128xf32>
      %48 = vector.shape_cast %47 : vector<1x1x128xf32> to vector<1x128xf32>
      %49 = vector.shape_cast %46 : vector<1x128xf32> to vector<1x1x128xf32>
      tpu.vector_store %arg6[%c0_23, %c0_24, %c0_25], %49 {strides = array<i32>} : memref<1x1x128xf32, #tpu.memory_space<vmem>>, vector<1x1x128xf32>,
    } else {
    }
    return
  }
  func.func @transform_0(%arg0: i32, %arg1: i32) -> (i32, i32) {
    %c0_i32 = arith.constant 0 : i32
    %c0_i32_0 = arith.constant 0 : i32
    return %arg0, %c0_i32 : i32, i32
  }
  func.func @transform_1(%arg0: i32, %arg1: i32) -> (i32, i32) {
    %c0_i32 = arith.constant 0 : i32
    %c0_i32_0 = arith.constant 0 : i32
    return %c0_i32, %arg1 : i32, i32
  }
  func.func @transform_2(%arg0: i32, %arg1: i32) -> (i32, i32) {
    %c0_i32 = arith.constant 0 : i32
    return %arg0, %arg1 : i32, i32
  }
  func.func @transform_3(%arg0: i32, %arg1: i32) -> (i32, i32, i32) {
    %c0_i32 = arith.constant 0 : i32
    %c0_i32_0 = arith.constant 0 : i32
    return %arg0, %c0_i32, %arg1 : i32, i32, i32
  }
  func.func @transform_4(%arg0: i32, %arg1: i32) -> (i32, i32, i32) {
    %c0_i32 = arith.constant 0 : i32
    %c0_i32_0 = arith.constant 0 : i32
    return %arg0, %c0_i32, %arg1 : i32, i32, i32
  }
}

module attributes {stable_mosaic.version = 11 : i64} {
  func.func @_bn_act_kernel(%arg0: i32, %arg1: memref<16x128xbf16, #tpu.memory_space<vmem>>, %arg2: memref<1x128xf32, #tpu.memory_space<vmem>>, %arg3: memref<1x128xf32, #tpu.memory_space<vmem>>, %arg4: memref<16x128xf32, #tpu.memory_space<vmem>>) attributes {dimension_semantics = [#tpu.dimension_semantics<parallel>], iteration_bounds = array<i64: 1>, scalar_prefetch = 0 : i64, scratch_operands = 0 : i64, tpu.core_type = #tpu.core_type<tc>, window_params = [{transform_indices = @transform_0, window_bounds = array<i64: 16, 128>}, {pipeline_mode = #tpu.pipeline_mode<synchronous>, transform_indices = @transform_1, window_bounds = array<i64: 1, 128>}, {pipeline_mode = #tpu.pipeline_mode<synchronous>, transform_indices = @transform_2, window_bounds = array<i64: 1, 128>}, {transform_indices = @transform_3, window_bounds = array<i64: 16, 128>}]} {
    %c0 = arith.constant 0 : index
    %c0_0 = arith.constant 0 : index
    %0 = vector.load %arg1[%c0, %c0_0] : memref<16x128xbf16, #tpu.memory_space<vmem>>, vector<16x128xbf16>
    %1 = arith.extf %0 : vector<16x128xbf16> to vector<16x128xf32>
    %c0_1 = arith.constant 0 : index
    %c0_2 = arith.constant 0 : index
    %2 = vector.load %arg2[%c0_1, %c0_2] : memref<1x128xf32, #tpu.memory_space<vmem>>, vector<1x128xf32>
    %3 = vector.broadcast %2 : vector<1x128xf32> to vector<16x128xf32>
    %4 = arith.mulf %1, %3 : vector<16x128xf32>
    %c0_3 = arith.constant 0 : index
    %c0_4 = arith.constant 0 : index
    %5 = vector.load %arg3[%c0_3, %c0_4] : memref<1x128xf32, #tpu.memory_space<vmem>>, vector<1x128xf32>
    %6 = vector.broadcast %5 : vector<1x128xf32> to vector<16x128xf32>
    %7 = arith.addf %4, %6 : vector<16x128xf32>
    %cst = arith.constant 0.000000e+00 : f32
    %8 = vector.broadcast %cst : f32 to vector<16x128xf32>
    %9 = arith.cmpf oge, %7, %8 : vector<16x128xf32>
    %cst_5 = arith.constant 0.00999999977 : f32
    %10 = vector.broadcast %cst_5 : f32 to vector<16x128xf32>
    %11 = arith.mulf %10, %7 : vector<16x128xf32>
    %12 = arith.select %9, %7, %11 : vector<16x128xi1>, vector<16x128xf32>
    %c0_6 = arith.constant 0 : index
    %c0_7 = arith.constant 0 : index
    %13 = vector.load %arg4[%c0_6, %c0_7] : memref<16x128xf32, #tpu.memory_space<vmem>>, vector<16x128xf32>
    tpu.vector_store %arg4[%c0_6, %c0_7], %12 {strides = array<i32>} : memref<16x128xf32, #tpu.memory_space<vmem>>, vector<16x128xf32>,
    return
  }
  func.func @transform_0(%arg0: i32) -> (i32, i32) {
    %c0_i32 = arith.constant 0 : i32
    %c0_i32_0 = arith.constant 0 : i32
    return %arg0, %c0_i32 : i32, i32
  }
  func.func @transform_1(%arg0: i32) -> (i32, i32) {
    %c0_i32 = arith.constant 0 : i32
    %c0_i32_0 = arith.constant 0 : i32
    %c0_i32_1 = arith.constant 0 : i32
    return %c0_i32, %c0_i32_0 : i32, i32
  }
  func.func @transform_2(%arg0: i32) -> (i32, i32) {
    %c0_i32 = arith.constant 0 : i32
    %c0_i32_0 = arith.constant 0 : i32
    %c0_i32_1 = arith.constant 0 : i32
    return %c0_i32, %c0_i32_0 : i32, i32
  }
  func.func @transform_3(%arg0: i32) -> (i32, i32) {
    %c0_i32 = arith.constant 0 : i32
    %c0_i32_0 = arith.constant 0 : i32
    return %arg0, %c0_i32 : i32, i32
  }
}

module attributes {stable_mosaic.version = 11 : i64} {
  func.func @_bn_act_linear_stats_kernel(%arg0: i32, %arg1: i32, %arg2: memref<16x128xbf16, #tpu.memory_space<vmem>>, %arg3: memref<1x128xf32, #tpu.memory_space<vmem>>, %arg4: memref<1x128xf32, #tpu.memory_space<vmem>>, %arg5: memref<128x128xbf16, #tpu.memory_space<vmem>>, %arg6: memref<16x128xbf16, #tpu.memory_space<vmem>>, %arg7: memref<1x1x128xf32, #tpu.memory_space<vmem>>, %arg8: memref<1x1x128xf32, #tpu.memory_space<vmem>>) attributes {dimension_semantics = [#tpu.dimension_semantics<parallel>, #tpu.dimension_semantics<parallel>], iteration_bounds = array<i64: 1, 1>, scalar_prefetch = 0 : i64, scratch_operands = 0 : i64, tpu.core_type = #tpu.core_type<tc>, window_params = [{transform_indices = @transform_0, window_bounds = array<i64: 16, 128>}, {pipeline_mode = #tpu.pipeline_mode<synchronous>, transform_indices = @transform_1, window_bounds = array<i64: 1, 128>}, {pipeline_mode = #tpu.pipeline_mode<synchronous>, transform_indices = @transform_2, window_bounds = array<i64: 1, 128>}, {transform_indices = @transform_3, window_bounds = array<i64: 128, 128>}, {transform_indices = @transform_4, window_bounds = array<i64: 16, 128>}, {transform_indices = @transform_5, window_bounds = array<i64: 1, 1, 128>}, {transform_indices = @transform_6, window_bounds = array<i64: 1, 1, 128>}]} {
    %c0 = arith.constant 0 : index
    %c0_0 = arith.constant 0 : index
    %0 = vector.load %arg2[%c0, %c0_0] : memref<16x128xbf16, #tpu.memory_space<vmem>>, vector<16x128xbf16>
    %1 = arith.extf %0 : vector<16x128xbf16> to vector<16x128xf32>
    %c0_1 = arith.constant 0 : index
    %c0_2 = arith.constant 0 : index
    %2 = vector.load %arg3[%c0_1, %c0_2] : memref<1x128xf32, #tpu.memory_space<vmem>>, vector<1x128xf32>
    %3 = vector.broadcast %2 : vector<1x128xf32> to vector<16x128xf32>
    %4 = arith.mulf %1, %3 : vector<16x128xf32>
    %c0_3 = arith.constant 0 : index
    %c0_4 = arith.constant 0 : index
    %5 = vector.load %arg4[%c0_3, %c0_4] : memref<1x128xf32, #tpu.memory_space<vmem>>, vector<1x128xf32>
    %6 = vector.broadcast %5 : vector<1x128xf32> to vector<16x128xf32>
    %7 = arith.addf %4, %6 : vector<16x128xf32>
    %cst = arith.constant 0.000000e+00 : f32
    %8 = vector.broadcast %cst : f32 to vector<16x128xf32>
    %9 = arith.cmpf oge, %7, %8 : vector<16x128xf32>
    %cst_5 = arith.constant 0.00999999977 : f32
    %10 = vector.broadcast %cst_5 : f32 to vector<16x128xf32>
    %11 = arith.mulf %10, %7 : vector<16x128xf32>
    %12 = arith.select %9, %7, %11 : vector<16x128xi1>, vector<16x128xf32>
    %13 = arith.truncf %12 : vector<16x128xf32> to vector<16x128xbf16>
    %c0_6 = arith.constant 0 : index
    %c0_7 = arith.constant 0 : index
    %14 = vector.load %arg5[%c0_6, %c0_7] : memref<128x128xbf16, #tpu.memory_space<vmem>>, vector<128x128xbf16>
    %cst_8 = arith.constant dense<0.000000e+00> : vector<16x128xf32>
    %15 = tpu.matmul %13, %14, %cst_8 {dimension_numbers = #tpu.dot_dimension_numbers<[1], [0], [0], [1], [0, 0, 1, 1], [], []>} : vector<16x128xbf16>, vector<128x128xbf16>, vector<16x128xf32> -> vector<16x128xf32>
    %16 = arith.truncf %15 : vector<16x128xf32> to vector<16x128xbf16>
    %c0_9 = arith.constant 0 : index
    %c0_10 = arith.constant 0 : index
    %17 = vector.load %arg6[%c0_9, %c0_10] : memref<16x128xbf16, #tpu.memory_space<vmem>>, vector<16x128xbf16>
    tpu.vector_store %arg6[%c0_9, %c0_10], %16 {strides = array<i32>} : memref<16x128xbf16, #tpu.memory_space<vmem>>, vector<16x128xbf16>,
    %18 = arith.extf %16 : vector<16x128xbf16> to vector<16x128xf32>
    %cst_11 = arith.constant dense<0.000000e+00> : vector<128xf32>
    %19 = vector.multi_reduction <add>, %18, %cst_11 [0] : vector<16x128xf32> to vector<128xf32>
    %20 = vector.shape_cast %19 : vector<128xf32> to vector<1x128xf32>
    %cst_12 = arith.constant 6.250000e-02 : f32
    %21 = vector.broadcast %cst_12 : f32 to vector<1x128xf32>
    %22 = arith.mulf %20, %21 : vector<1x128xf32>
    %23 = vector.broadcast %22 : vector<1x128xf32> to vector<16x128xf32>
    %24 = arith.subf %18, %23 : vector<16x128xf32>
    %c0_13 = arith.constant 0 : index
    %c0_14 = arith.constant 0 : index
    %c0_15 = arith.constant 0 : index
    %25 = vector.load %arg7[%c0_13, %c0_14, %c0_15] : memref<1x1x128xf32, #tpu.memory_space<vmem>>, vector<1x1x128xf32>
    %26 = vector.shape_cast %25 : vector<1x1x128xf32> to vector<1x128xf32>
    %27 = vector.shape_cast %20 : vector<1x128xf32> to vector<1x1x128xf32>
    tpu.vector_store %arg7[%c0_13, %c0_14, %c0_15], %27 {strides = array<i32>} : memref<1x1x128xf32, #tpu.memory_space<vmem>>, vector<1x1x128xf32>,
    %28 = arith.mulf %24, %24 : vector<16x128xf32>
    %cst_16 = arith.constant dense<0.000000e+00> : vector<128xf32>
    %29 = vector.multi_reduction <add>, %28, %cst_16 [0] : vector<16x128xf32> to vector<128xf32>
    %30 = vector.shape_cast %29 : vector<128xf32> to vector<1x128xf32>
    %c0_17 = arith.constant 0 : index
    %c0_18 = arith.constant 0 : index
    %c0_19 = arith.constant 0 : index
    %31 = vector.load %arg8[%c0_17, %c0_18, %c0_19] : memref<1x1x128xf32, #tpu.memory_space<vmem>>, vector<1x1x128xf32>
    %32 = vector.shape_cast %31 : vector<1x1x128xf32> to vector<1x128xf32>
    %33 = vector.shape_cast %30 : vector<1x128xf32> to vector<1x1x128xf32>
    tpu.vector_store %arg8[%c0_17, %c0_18, %c0_19], %33 {strides = array<i32>} : memref<1x1x128xf32, #tpu.memory_space<vmem>>, vector<1x1x128xf32>,
    %c0_i32 = arith.constant 0 : i32
    %34 = arith.cmpi eq, %arg0, %c0_i32 : i32
    %35 = arith.extui %34 : i1 to i32
    %c0_i32_20 = arith.constant 0 : i32
    %36 = arith.cmpi ne, %35, %c0_i32_20 : i32
    scf.if %36 {
      %37 = tpu.iota {dimensions = array<i32: 0>} : vector<16x1xi32>
      %c8_i32 = arith.constant 8 : i32
      %38 = vector.broadcast %c8_i32 : i32 to vector<16x1xi32>
      %39 = arith.cmpi slt, %37, %38 : vector<16x1xi32>
      %cst_21 = arith.constant 0.000000e+00 : f32
      %40 = vector.shape_cast %39 : vector<16x1xi1> to vector<16x1xi1>
      %41 = vector.broadcast %40 : vector<16x1xi1> to vector<16x128xi1>
      %42 = vector.broadcast %cst_21 : f32 to vector<16x128xf32>
      %43 = arith.select %41, %18, %42 : vector<16x128xi1>, vector<16x128xf32>
      %cst_22 = arith.constant dense<0.000000e+00> : vector<128xf32>
      %44 = vector.multi_reduction <add>, %43, %cst_22 [0] : vector<16x128xf32> to vector<128xf32>
      %45 = vector.shape_cast %44 : vector<128xf32> to vector<1x128xf32>
      %cst_23 = arith.constant 1.250000e-01 : f32
      %46 = vector.broadcast %cst_23 : f32 to vector<1x128xf32>
      %47 = arith.mulf %45, %46 : vector<1x128xf32>
      %48 = vector.broadcast %47 : vector<1x128xf32> to vector<16x128xf32>
      %49 = arith.subf %18, %48 : vector<16x128xf32>
      %cst_24 = arith.constant 0.000000e+00 : f32
      %50 = vector.shape_cast %39 : vector<16x1xi1> to vector<16x1xi1>
      %51 = vector.broadcast %50 : vector<16x1xi1> to vector<16x128xi1>
      %52 = vector.broadcast %cst_24 : f32 to vector<16x128xf32>
      %53 = arith.select %51, %49, %52 : vector<16x128xi1>, vector<16x128xf32>
      %c0_25 = arith.constant 0 : index
      %c0_26 = arith.constant 0 : index
      %c0_27 = arith.constant 0 : index
      %54 = vector.load %arg7[%c0_25, %c0_26, %c0_27] : memref<1x1x128xf32, #tpu.memory_space<vmem>>, vector<1x1x128xf32>
      %55 = vector.shape_cast %54 : vector<1x1x128xf32> to vector<1x128xf32>
      %56 = vector.shape_cast %45 : vector<1x128xf32> to vector<1x1x128xf32>
      tpu.vector_store %arg7[%c0_25, %c0_26, %c0_27], %56 {strides = array<i32>} : memref<1x1x128xf32, #tpu.memory_space<vmem>>, vector<1x1x128xf32>,
      %57 = arith.mulf %53, %53 : vector<16x128xf32>
      %cst_28 = arith.constant dense<0.000000e+00> : vector<128xf32>
      %58 = vector.multi_reduction <add>, %57, %cst_28 [0] : vector<16x128xf32> to vector<128xf32>
      %59 = vector.shape_cast %58 : vector<128xf32> to vector<1x128xf32>
      %c0_29 = arith.constant 0 : index
      %c0_30 = arith.constant 0 : index
      %c0_31 = arith.constant 0 : index
      %60 = vector.load %arg8[%c0_29, %c0_30, %c0_31] : memref<1x1x128xf32, #tpu.memory_space<vmem>>, vector<1x1x128xf32>
      %61 = vector.shape_cast %60 : vector<1x1x128xf32> to vector<1x128xf32>
      %62 = vector.shape_cast %59 : vector<1x128xf32> to vector<1x1x128xf32>
      tpu.vector_store %arg8[%c0_29, %c0_30, %c0_31], %62 {strides = array<i32>} : memref<1x1x128xf32, #tpu.memory_space<vmem>>, vector<1x1x128xf32>,
    } else {
    }
    return
  }
  func.func @transform_0(%arg0: i32, %arg1: i32) -> (i32, i32) {
    %c0_i32 = arith.constant 0 : i32
    %c0_i32_0 = arith.constant 0 : i32
    return %arg0, %c0_i32 : i32, i32
  }
  func.func @transform_1(%arg0: i32, %arg1: i32) -> (i32, i32) {
    %c0_i32 = arith.constant 0 : i32
    %c0_i32_0 = arith.constant 0 : i32
    %c0_i32_1 = arith.constant 0 : i32
    return %c0_i32, %c0_i32_0 : i32, i32
  }
  func.func @transform_2(%arg0: i32, %arg1: i32) -> (i32, i32) {
    %c0_i32 = arith.constant 0 : i32
    %c0_i32_0 = arith.constant 0 : i32
    %c0_i32_1 = arith.constant 0 : i32
    return %c0_i32, %c0_i32_0 : i32, i32
  }
  func.func @transform_3(%arg0: i32, %arg1: i32) -> (i32, i32) {
    %c0_i32 = arith.constant 0 : i32
    %c0_i32_0 = arith.constant 0 : i32
    return %c0_i32, %arg1 : i32, i32
  }
  func.func @transform_4(%arg0: i32, %arg1: i32) -> (i32, i32) {
    %c0_i32 = arith.constant 0 : i32
    return %arg0, %arg1 : i32, i32
  }
  func.func @transform_5(%arg0: i32, %arg1: i32) -> (i32, i32, i32) {
    %c0_i32 = arith.constant 0 : i32
    %c0_i32_0 = arith.constant 0 : i32
    return %arg0, %c0_i32, %arg1 : i32, i32, i32
  }
  func.func @transform_6(%arg0: i32, %arg1: i32) -> (i32, i32, i32) {
    %c0_i32 = arith.constant 0 : i32
    %c0_i32_0 = arith.constant 0 : i32
    return %arg0, %c0_i32, %arg1 : i32, i32, i32
  }
}

</mosaic_0001>

<llo_original>
// kernel: mlp_forward.5
$region0: #{mlp_forward.5}
  #allocation0 [shape = 'u32[]', space=smem, size = 0x4, offset = 0x4, fixed_abs, tag = 'smem constant byte address 0x4 - core index']
  #allocation1 [shape = 'u32[144,128]{1,0:T(1,128)}', space=vmem, size = 0x12000, scoped, tag = 'internal scratch']
  %s0 = inlined_call_operand.vmem [shape: bf16[16,128], index: 0, kind: input, shape index: {}]
  %s1 = inlined_call_operand.vmem [shape: f32[1,128], index: 1, kind: input, shape index: {}]
  %s2 = inlined_call_operand.vmem [shape: f32[1,128], index: 2, kind: input, shape index: {}]
  %s3 = inlined_call_operand.vmem [shape: f32[16,128], index: 3, kind: output, shape index: {}]
  %s4 = sld [smem:[#allocation0]]
  $region22: #{mlp_forward.5} parent=0
    _
  %s6 = ssub.s32 1, %s4
  %s7 = scalar_select 0, %s6, %s4
  // Predicated region
  $region2: #{mlp_forward.5} parent=0 // pred_check
    _
  $region3: #{mlp_forward.5} parent=0 // pred_check_branch
    %9 = sbr.rel (0) target = $region5
  $region4: #{mlp_forward.5} parent=0 // pred_region
    _
  $region5: #{mlp_forward.5} parent=0 // pred_fallthru
    _
  // Predicated region
  $region6: #{mlp_forward.5} parent=0 // pred_check
    _
  $region7: #{mlp_forward.5} parent=0 // pred_check_branch
    %11 = sbr.rel (0) target = $region9
  $region8: #{mlp_forward.5} parent=0 // pred_region
    _
  $region9: #{mlp_forward.5} parent=0 // pred_fallthru
    _
  // Predicated region
  $region10: #{mlp_forward.5} parent=0 // pred_check
    _
  $region11: #{mlp_forward.5} parent=0 // pred_check_branch
    %13 = sbr.rel (0) target = $region13
  $region12: #{mlp_forward.5} parent=0 // pred_region
    _
  $region13: #{mlp_forward.5} parent=0 // pred_fallthru
    _
  %v14 = vld [vmem:[%s0] sm:$0xf]
  %v15 = vld [vmem:[%s0 + $0x4] sm:$0xf]
  %v16 = vunpack.c.l.bf16 %v14
  %v17 = vunpack.c.l.bf16 %v15
  %v18 = vld [vmem:[%s1] sm:$0x1]
  %v20 = vlaneseq
  %v21 = vshrl.u32 %v20, 7
  %v22 = vsub.s32 0, %v21
  %v23 = vrot.slane %v18, %v22
  %v25 = vmul.f32 %v16, %v23
  %v26 = vmul.f32 %v17, %v23
  %v27 = vld [vmem:[%s2] sm:$0x1]
  %v29 = vlaneseq
  %v30 = vshrl.u32 %v29, 7
  %v31 = vsub.s32 0, %v30
  %v32 = vrot.slane %v27, %v31
  %v34 = vadd.f32 %v25, %v32
  %v35 = vadd.f32 %v26, %v32
  %vm36 = vcmp.ge.f32.partialorder %v34, 0.0
  %vm37 = vcmp.ge.f32.partialorder %v35, 0.0
  %v38 = vmul.f32 %v34, 0.01
  %v39 = vmul.f32 %v35, 0.01
  %v40 = vsel %vm36, %v34, %v38
  %v41 = vsel %vm37, %v35, %v39
  %42 = vst [vmem:[%s3] sm:$0xff] %v40
  %43 = vst [vmem:[%s3 + $0x8] sm:$0xff] %v41
  // Predicated region
  $region14: #{mlp_forward.5} parent=0 // pred_check
    _
  $region15: #{mlp_forward.5} parent=0 // pred_check_branch
    %45 = sbr.rel (0) target = $region17
  $region16: #{mlp_forward.5} parent=0 // pred_region
    _
  $region17: #{mlp_forward.5} parent=0 // pred_fallthru
    _
  // Predicated region
  $region18: #{mlp_forward.5} parent=0 // pred_check
    _
  $region19: #{mlp_forward.5} parent=0 // pred_check_branch
    %47 = sbr.rel (0) target = $region21
  $region20: #{mlp_forward.5} parent=0 // pred_region
    _
  $region21: #{mlp_forward.5} parent=0 // pred_fallthru
    _

// kernel: mlp_forward.3
$region0: #{mlp_forward.3}
  #allocation0 [shape = 'u32[]', space=smem, size = 0x4, offset = 0x4, fixed_abs, tag = 'smem constant byte address 0x4 - core index']
  #allocation1 [shape = 'u32[144,128]{1,0:T(1,128)}', space=vmem, size = 0x12000, scoped, tag = 'internal scratch']
  %s0 = inlined_call_operand.vmem [shape: bf16[16,128], index: 0, kind: input, shape index: {}]
  %s1 = inlined_call_operand.hbm [shape: bf16[128,128], index: 1, kind: input, shape index: {}]
  %s2 = inlined_call_operand.vmem [shape: bf16[16,128], index: 2, kind: output, shape index: {0}]
  %s3 = inlined_call_operand.vmem [shape: f32[1,1,128], index: 3, kind: output, shape index: {1}]
  %s4 = inlined_call_operand.vmem [shape: f32[1,1,128], index: 4, kind: output, shape index: {2}]
  %5 = xla_tuple %s2, %s3, %s4
  %s6 = sld [smem:[#allocation0]]
  $region42: #{mlp_forward.3} parent=0
    _
  %s8 = ssub.s32 1, %s6
  %s9 = scalar_select 0, %s8, %s6
  $region1: #{mlp_forward.3} parent=0
    #allocation2 [shape = 'u8[32768]{0}', space=vmem, size = 0x8000, scoped, tag = 'input window, operand 1, single buffered']
    #allocation3 [shape = 's32[1]{0}', space=sflag, size = 0x4, scoped, tag = 'scoped memory for mlp_forward.3']
    %10 = vsyncpa [#allocation3], 0
    // Predicated region
    $region2: #{mlp_forward.3} parent=1 // pred_check
      _
    $region3: #{mlp_forward.3} parent=1 // pred_check_branch
      %12 = sbr.rel (0) target = $region5
    $region4: #{mlp_forward.3} parent=1 // pred_region
      _
    $region5: #{mlp_forward.3} parent=1 // pred_fallthru
      _
    // Predicated region
    $region6: #{mlp_forward.3} parent=1 // pred_check
      _
    $region7: #{mlp_forward.3} parent=1 // pred_check_branch
      %14 = sbr.rel (0) target = $region9
    $region8: #{mlp_forward.3} parent=1 // pred_region
      %s16 = ssub.s32 1024, 1024
      %17 = vsyncadd [#allocation3], %s16
      %s18 = sshll.u32 [#allocation2], 4
      %s19 = int_to_ptr.vmem [resolvable:$true] %s18
      %24 = dma.hbm_to_vmem [thread:$0]  %s1, 1024, %s19, [#allocation3], 64, 64, 4
    $region9: #{mlp_forward.3} parent=1 // pred_fallthru
      _
    // Predicated region
    $region10: #{mlp_forward.3} parent=1 // pred_check
      _
    $region11: #{mlp_forward.3} parent=1 // pred_check_branch
      %26 = sbr.rel (0) target = $region13
    $region12: #{mlp_forward.3} parent=1 // pred_region
      %27 = dma.done [#allocation3], 1024
    $region13: #{mlp_forward.3} parent=1 // pred_fallthru
      _
    %v29 = vld [vmem:[%s0] sm:$0xf]
    %v30 = vld [vmem:[%s0 + $0x4] sm:$0xf]
    %v31 = vld [vmem:[#allocation2] sm:$0xf]
    %v32 = vld [vmem:[#allocation2 + $0x4] sm:$0xf]
    %v33 = vld [vmem:[#allocation2 + $0x8] sm:$0xf]
    %v34 = vld [vmem:[#allocation2 + $0xc] sm:$0xf]
    %v35 = vld [vmem:[#allocation2 + $0x10] sm:$0xf]
    %v36 = vld [vmem:[#allocation2 + $0x14] sm:$0xf]
    %v37 = vld [vmem:[#allocation2 + $0x18] sm:$0xf]
    %v38 = vld [vmem:[#allocation2 + $0x1c] sm:$0xf]
    %v39 = vld [vmem:[#allocation2 + $0x20] sm:$0xf]
    %v40 = vld [vmem:[#allocation2 + $0x24] sm:$0xf]
    %v41 = vld [vmem:[#allocation2 + $0x28] sm:$0xf]
    %v42 = vld [vmem:[#allocation2 + $0x2c] sm:$0xf]
    %v43 = vld [vmem:[#allocation2 + $0x30] sm:$0xf]
    %v44 = vld [vmem:[#allocation2 + $0x34] sm:$0xf]
    %v45 = vld [vmem:[#allocation2 + $0x38] sm:$0xf]
    %v46 = vld [vmem:[#allocation2 + $0x3c] sm:$0xf]
    %v49 = vunpack.c.l.b16 %v29
    %v50 = vunpack.c.l.b16 %v30
    %v51 = vpack.c.b16 %v50, %v49
    %v69 = vunpack.c.l.b16 %v31
    %v70 = vunpack.c.l.b16 %v32
    %v71 = vunpack.c.l.b16 %v33
    %v72 = vunpack.c.l.b16 %v34
    %v73 = vunpack.c.l.b16 %v35
    %v74 = vunpack.c.l.b16 %v36
    %v75 = vunpack.c.l.b16 %v37
    %v76 = vunpack.c.l.b16 %v38
    %v77 = vunpack.c.l.b16 %v39
    %v78 = vunpack.c.l.b16 %v40
    %v79 = vunpack.c.l.b16 %v41
    %v80 = vunpack.c.l.b16 %v42
    %v81 = vunpack.c.l.b16 %v43
    %v82 = vunpack.c.l.b16 %v44
    %v83 = vunpack.c.l.b16 %v45
    %v84 = vunpack.c.l.b16 %v46
    %v85 = vpack.c.b16 %v70, %v69
    %v86 = vpack.c.b16 %v72, %v71
    %v87 = vpack.c.b16 %v74, %v73
    %v88 = vpack.c.b16 %v76, %v75
    %v89 = vpack.c.b16 %v78, %v77
    %v90 = vpack.c.b16 %v80, %v79
    %v91 = vpack.c.b16 %v82, %v81
    %v92 = vpack.c.b16 %v84, %v83
    %101 = vmatprep.subr.bf16.mxu0 0
    %102 = vmatpush1.bf16.msra.mxu0 %v85
    %103 = vmatprep.subr.bf16.mxu0 0
    %104 = vmatpush1.bf16.msra.mxu0 %v86
    %105 = vmatprep.subr.bf16.mxu0 0
    %106 = vmatpush1.bf16.msra.mxu0 %v87
    %107 = vmatprep.subr.bf16.mxu0 0
    %108 = vmatpush1.bf16.msra.mxu0 %v88
    %109 = vmatprep.subr.bf16.mxu0 0
    %110 = vmatpush1.bf16.msra.mxu0 %v89
    %111 = vmatprep.subr.bf16.mxu0 0
    %112 = vmatpush1.bf16.msra.mxu0 %v90
    %113 = vmatprep.subr.bf16.mxu0 0
    %114 = vmatpush1.bf16.msra.mxu0 %v91
    %115 = vmatprep.subr.bf16.mxu0 0
    %116 = vmatpush1.bf16.msra.mxu0 %v92
    %117 = vmatprep.subr.bf16.mxu0 0
    %118 = vmatpush1.bf16.msra.mxu0 0
    %119 = vmatprep.subr.bf16.mxu0 0
    %120 = vmatpush1.bf16.msra.mxu0 0
    %121 = vmatprep.subr.bf16.mxu0 0
    %122 = vmatpush1.bf16.msra.mxu0 0
    %123 = vmatprep.subr.bf16.mxu0 0
    %124 = vmatpush1.bf16.msra.mxu0 0
    %125 = vmatprep.subr.bf16.mxu0 0
    %126 = vmatpush1.bf16.msra.mxu0 0
    %127 = vmatprep.subr.bf16.mxu0 0
    %128 = vmatpush1.bf16.msra.mxu0 0
    %129 = vmatprep.subr.bf16.mxu0 0
    %130 = vmatpush1.bf16.msra.mxu0 0
    %131 = vmatprep.subr.bf16.mxu0 0
    %132 = vmatpush1.bf16.msra.mxu0 0
    %133 = vmatprep.mubr.bf16.mxu0 0
    %134 = vmatmul.mubr.bf16.gmra.mrb[0].mxu0 %v51
    %v135 = vpop.f32.mrb[0].mxu0
    %v136 = vadd.f32 0.0, %v135
    %v137 = vpop.f32.mrb[0].mxu0
    %v138 = vpop.f32.mrb[0].mxu0
    %v139 = vadd.f32 0.0, %v138
    %v140 = vpop.f32.mrb[0].mxu0
    %141 = vdwg.mxu0
    %v142 = vpack.c.bf16 %v139, %v136
    %v144 = vunpack.c.l.b16 %v142
    %v145 = vunpack.c.h.b16 %v142
    %v146 = vpack.c.b16 %v144, %v144
    %v147 = vpack.c.b16 %v145, %v145
    %150 = vst [vmem:[%s2] sm:$0xf] %v146
    %151 = vst [vmem:[%s2 + $0x4] sm:$0xf] %v147
    %v152 = vunpack.c.l.bf16 %v142
    %v153 = vunpack.c.h.bf16 %v142
    %v154 = vadd.f32 %v152, %v153
    %v155 = vrot.slane %v154, 4
    %v156 = vadd.f32 %v154, %v155
    %v157 = vrot.slane %v156, 2
    %v158 = vadd.f32 %v156, %v157
    %v159 = vrot.slane %v158, 1
    %v160 = vadd.f32 %v158, %v159
    %v161 = vmul.f32 %v160, 0.0625
    %v162 = vsub.f32 %v152, %v161
    %v163 = vsub.f32 %v153, %v161
    %164 = vst [vmem:[%s3] sm:$0x1] %v160
    %v165 = vmul.f32 %v162, %v162
    %v166 = vmul.f32 %v163, %v163
    %v167 = vadd.f32 %v165, %v166
    %v168 = vrot.slane %v167, 4
    %v169 = vadd.f32 %v167, %v168
    %v170 = vrot.slane %v169, 2
    %v171 = vadd.f32 %v169, %v170
    %v172 = vrot.slane %v171, 1
    %v173 = vadd.f32 %v171, %v172
    %174 = vst [vmem:[%s4] sm:$0x1] %v173
    %p175 = scmp.eq.s32.totalorder 0, 0
    // Predicated region
    $region14: #{mlp_forward.3} parent=1 // pred_check
      %p176 = pneg %p175
    $region15: #{mlp_forward.3} parent=1 // pred_check_branch
      %178 = sbr.rel (%p176) target = $region17
    $region16: #{mlp_forward.3} parent=1 // pred_region
      %v179 = vlaneseq
      %v180 = vshrl.u32 %v179, 7
      %v181 = vadd.s32 %v180, 8
      %vm182 = vcmp.lt.s32.totalorder %v180, 8
      %vm183 = vcmp.lt.s32.totalorder %v181, 8
      %v184 = vsel %vm182, 1, 0
      %v185 = vsel %vm183, 1, 0
      %vm186 = vcmp.eq.s32.totalorder %v184, 1
      %vm187 = vcmp.eq.s32.totalorder %v185, 1
      %v188 = vsel %vm186, %v152, 0.0
      %v189 = vsel %vm187, %v153, 0.0
      %v190 = vadd.f32 %v188, %v189
      %v191 = vrot.slane %v190, 4
      %v192 = vadd.f32 %v190, %v191
      %v193 = vrot.slane %v192, 2
      %v194 = vadd.f32 %v192, %v193
      %v195 = vrot.slane %v194, 1
      %v196 = vadd.f32 %v194, %v195
      %v197 = vmul.f32 %v196, 0.125
      %v198 = vsub.f32 %v152, %v197
      %v199 = vsub.f32 %v153, %v197
      %v200 = vsel %vm186, %v198, 0.0
      %v201 = vsel %vm187, %v199, 0.0
      %202 = vst [vmem:[%s3] sm:$0x1] %v196
      %v203 = vmul.f32 %v200, %v200
      %v204 = vmul.f32 %v201, %v201
      %v205 = vadd.f32 %v203, %v204
      %v206 = vrot.slane %v205, 4
      %v207 = vadd.f32 %v205, %v206
      %v208 = vrot.slane %v207, 2
      %v209 = vadd.f32 %v207, %v208
      %v210 = vrot.slane %v209, 1
      %v211 = vadd.f32 %v209, %v210
      %212 = vst [vmem:[%s4] sm:$0x1] %v211
    $region17: #{mlp_forward.3} parent=1 // pred_fallthru
      _
    // Predicated region
    $region18: #{mlp_forward.3} parent=1 // pred_check
      _
    $region19: #{mlp_forward.3} parent=1 // pred_check_branch
      %214 = sbr.rel (0) target = $region21
    $region20: #{mlp_forward.3} parent=1 // pred_region
      _
    $region21: #{mlp_forward.3} parent=1 // pred_fallthru
      _
    // Predicated region
    $region22: #{mlp_forward.3} parent=1 // pred_check
      _
    $region23: #{mlp_forward.3} parent=1 // pred_check_branch
      %216 = sbr.rel (0) target = $region25
    $region24: #{mlp_forward.3} parent=1 // pred_region
      _
    $region25: #{mlp_forward.3} parent=1 // pred_fallthru
      _
    // Predicated region
    $region26: #{mlp_forward.3} parent=1 // pred_check
      _
    $region27: #{mlp_forward.3} parent=1 // pred_check_branch
      %218 = sbr.rel (0) target = $region29
    $region28: #{mlp_forward.3} parent=1 // pred_region
      _
    $region29: #{mlp_forward.3} parent=1 // pred_fallthru
      _
    // Predicated region
    $region30: #{mlp_forward.3} parent=1 // pred_check
      _
    $region31: #{mlp_forward.3} parent=1 // pred_check_branch
      %220 = sbr.rel (0) target = $region33
    $region32: #{mlp_forward.3} parent=1 // pred_region
      _
    $region33: #{mlp_forward.3} parent=1 // pred_fallthru
      _
    // Predicated region
    $region34: #{mlp_forward.3} parent=1 // pred_check
      _
    $region35: #{mlp_forward.3} parent=1 // pred_check_branch
      %222 = sbr.rel (0) target = $region37
    $region36: #{mlp_forward.3} parent=1 // pred_region
      _
    $region37: #{mlp_forward.3} parent=1 // pred_fallthru
      _
    // Predicated region
    $region38: #{mlp_forward.3} parent=1 // pred_check
      _
    $region39: #{mlp_forward.3} parent=1 // pred_check_branch
      %224 = sbr.rel (0) target = $region41
    $region40: #{mlp_forward.3} parent=1 // pred_region
      _
    $region41: #{mlp_forward.3} parent=1 // pred_fallthru
      _
    %225 = vsyncpa [#allocation3], 1

// kernel: mlp_forward.4
$region0: #{mlp_forward.4}
  #allocation0 [shape = 'u32[]', space=smem, size = 0x4, offset = 0x4, fixed_abs, tag = 'smem constant byte address 0x4 - core index']
  #allocation1 [shape = 'u32[144,128]{1,0:T(1,128)}', space=vmem, size = 0x12000, scoped, tag = 'internal scratch']
  %s0 = inlined_call_operand.vmem [shape: bf16[16,128], index: 0, kind: input, shape index: {}]
  %s1 = inlined_call_operand.vmem [shape: f32[1,128], index: 1, kind: input, shape index: {}]
  %s2 = inlined_call_operand.vmem [shape: f32[1,128], index: 2, kind: input, shape index: {}]
  %s3 = inlined_call_operand.vmem [shape: bf16[128,128], index: 3, kind: input, shape index: {}]
  %s4 = inlined_call_operand.vmem [shape: bf16[16,128], index: 4, kind: output, shape index: {0}]
  %s5 = inlined_call_operand.vmem [shape: f32[1,1,128], index: 5, kind: output, shape index: {1}]
  %s6 = inlined_call_operand.vmem [shape: f32[1,1,128], index: 6, kind: output, shape index: {2}]
  %7 = xla_tuple %s4, %s5, %s6
  %s8 = sld [smem:[#allocation0]]
  $region46: #{mlp_forward.4} parent=0
    _
  %s10 = ssub.s32 1, %s8
  %s11 = scalar_select 0, %s10, %s8
  // Predicated region
  $region2: #{mlp_forward.4} parent=0 // pred_check
    _
  $region3: #{mlp_forward.4} parent=0 // pred_check_branch
    %13 = sbr.rel (0) target = $region5
  $region4: #{mlp_forward.4} parent=0 // pred_region
    _
  $region5: #{mlp_forward.4} parent=0 // pred_fallthru
    _
  // Predicated region
  $region6: #{mlp_forward.4} parent=0 // pred_check
    _
  $region7: #{mlp_forward.4} parent=0 // pred_check_branch
    %15 = sbr.rel (0) target = $region9
  $region8: #{mlp_forward.4} parent=0 // pred_region
    _
  $region9: #{mlp_forward.4} parent=0 // pred_fallthru
    _
  // Predicated region
  $region10: #{mlp_forward.4} parent=0 // pred_check
    _
  $region11: #{mlp_forward.4} parent=0 // pred_check_branch
    %17 = sbr.rel (0) target = $region13
  $region12: #{mlp_forward.4} parent=0 // pred_region
    _
  $region13: #{mlp_forward.4} parent=0 // pred_fallthru
    _
  // Predicated region
  $region14: #{mlp_forward.4} parent=0 // pred_check
    _
  $region15: #{mlp_forward.4} parent=0 // pred_check_branch
    %19 = sbr.rel (0) target = $region17
  $region16: #{mlp_forward.4} parent=0 // pred_region
    _
  $region17: #{mlp_forward.4} parent=0 // pred_fallthru
    _
  %v21 = vld [vmem:[%s0] sm:$0xf]
  %v22 = vld [vmem:[%s0 + $0x4] sm:$0xf]
  %v23 = vunpack.c.l.bf16 %v21
  %v24 = vunpack.c.l.bf16 %v22
  %v25 = vld [vmem:[%s1] sm:$0x1]
  %v27 = vlaneseq
  %v28 = vshrl.u32 %v27, 7
  %v29 = vsub.s32 0, %v28
  %v30 = vrot.slane %v25, %v29
  %v32 = vmul.f32 %v23, %v30
  %v33 = vmul.f32 %v24, %v30
  %v34 = vld [vmem:[%s2] sm:$0x1]
  %v36 = vlaneseq
  %v37 = vshrl.u32 %v36, 7
  %v38 = vsub.s32 0, %v37
  %v39 = vrot.slane %v34, %v38
  %v41 = vadd.f32 %v32, %v39
  %v42 = vadd.f32 %v33, %v39
  %vm43 = vcmp.ge.f32.partialorder %v41, 0.0
  %vm44 = vcmp.ge.f32.partialorder %v42, 0.0
  %v45 = vmul.f32 %v41, 0.01
  %v46 = vmul.f32 %v42, 0.01
  %v47 = vsel %vm43, %v41, %v45
  %v48 = vsel %vm44, %v42, %v46
  %v49 = vpack.c.bf16 %v48, %v47
  %v50 = vld [vmem:[%s3] sm:$0xf]
  %v51 = vld [vmem:[%s3 + $0x4] sm:$0xf]
  %v52 = vld [vmem:[%s3 + $0x8] sm:$0xf]
  %v53 = vld [vmem:[%s3 + $0xc] sm:$0xf]
  %v54 = vld [vmem:[%s3 + $0x10] sm:$0xf]
  %v55 = vld [vmem:[%s3 + $0x14] sm:$0xf]
  %v56 = vld [vmem:[%s3 + $0x18] sm:$0xf]
  %v57 = vld [vmem:[%s3 + $0x1c] sm:$0xf]
  %v58 = vld [vmem:[%s3 + $0x20] sm:$0xf]
  %v59 = vld [vmem:[%s3 + $0x24] sm:$0xf]
  %v60 = vld [vmem:[%s3 + $0x28] sm:$0xf]
  %v61 = vld [vmem:[%s3 + $0x2c] sm:$0xf]
  %v62 = vld [vmem:[%s3 + $0x30] sm:$0xf]
  %v63 = vld [vmem:[%s3 + $0x34] sm:$0xf]
  %v64 = vld [vmem:[%s3 + $0x38] sm:$0xf]
  %v65 = vld [vmem:[%s3 + $0x3c] sm:$0xf]
  %v82 = vunpack.c.l.b16 %v50
  %v83 = vunpack.c.l.b16 %v51
  %v84 = vunpack.c.l.b16 %v52
  %v85 = vunpack.c.l.b16 %v53
  %v86 = vunpack.c.l.b16 %v54
  %v87 = vunpack.c.l.b16 %v55
  %v88 = vunpack.c.l.b16 %v56
  %v89 = vunpack.c.l.b16 %v57
  %v90 = vunpack.c.l.b16 %v58
  %v91 = vunpack.c.l.b16 %v59
  %v92 = vunpack.c.l.b16 %v60
  %v93 = vunpack.c.l.b16 %v61
  %v94 = vunpack.c.l.b16 %v62
  %v95 = vunpack.c.l.b16 %v63
  %v96 = vunpack.c.l.b16 %v64
  %v97 = vunpack.c.l.b16 %v65
  %v98 = vpack.c.b16 %v83, %v82
  %v99 = vpack.c.b16 %v85, %v84
  %v100 = vpack.c.b16 %v87, %v86
  %v101 = vpack.c.b16 %v89, %v88
  %v102 = vpack.c.b16 %v91, %v90
  %v103 = vpack.c.b16 %v93, %v92
  %v104 = vpack.c.b16 %v95, %v94
  %v105 = vpack.c.b16 %v97, %v96
  %114 = vmatprep.subr.bf16.mxu0 0
  %115 = vmatpush1.bf16.msra.mxu0 %v98
  %116 = vmatprep.subr.bf16.mxu0 0
  %117 = vmatpush1.bf16.msra.mxu0 %v99
  %118 = vmatprep.subr.bf16.mxu0 0
  %119 = vmatpush1.bf16.msra.mxu0 %v100
  %120 = vmatprep.subr.bf16.mxu0 0
  %121 = vmatpush1.bf16.msra.mxu0 %v101
  %122 = vmatprep.subr.bf16.mxu0 0
  %123 = vmatpush1.bf16.msra.mxu0 %v102
  %124 = vmatprep.subr.bf16.mxu0 0
  %125 = vmatpush1.bf16.msra.mxu0 %v103
  %126 = vmatprep.subr.bf16.mxu0 0
  %127 = vmatpush1.bf16.msra.mxu0 %v104
  %128 = vmatprep.subr.bf16.mxu0 0
  %129 = vmatpush1.bf16.msra.mxu0 %v105
  %130 = vmatprep.subr.bf16.mxu0 0
  %131 = vmatpush1.bf16.msra.mxu0 0
  %132 = vmatprep.subr.bf16.mxu0 0
  %133 = vmatpush1.bf16.msra.mxu0 0
  %134 = vmatprep.subr.bf16.mxu0 0
  %135 = vmatpush1.bf16.msra.mxu0 0
  %136 = vmatprep.subr.bf16.mxu0 0
  %137 = vmatpush1.bf16.msra.mxu0 0
  %138 = vmatprep.subr.bf16.mxu0 0
  %139 = vmatpush1.bf16.msra.mxu0 0
  %140 = vmatprep.subr.bf16.mxu0 0
  %141 = vmatpush1.bf16.msra.mxu0 0
  %142 = vmatprep.subr.bf16.mxu0 0
  %143 = vmatpush1.bf16.msra.mxu0 0
  %144 = vmatprep.subr.bf16.mxu0 0
  %145 = vmatpush1.bf16.msra.mxu0 0
  %146 = vmatprep.mubr.bf16.mxu0 0
  %147 = vmatmul.mubr.bf16.gmra.mrb[0].mxu0 %v49
  %v148 = vpop.f32.mrb[0].mxu0
  %v149 = vadd.f32 0.0, %v148
  %v150 = vpop.f32.mrb[0].mxu0
  %v151 = vpop.f32.mrb[0].mxu0
  %v152 = vadd.f32 0.0, %v151
  %v153 = vpop.f32.mrb[0].mxu0
  %154 = vdwg.mxu0
  %v155 = vpack.c.bf16 %v152, %v149
  %v157 = vunpack.c.l.b16 %v155
  %v158 = vunpack.c.h.b16 %v155
  %v159 = vpack.c.b16 %v157, %v157
  %v160 = vpack.c.b16 %v158, %v158
  %163 = vst [vmem:[%s4] sm:$0xf] %v159
  %164 = vst [vmem:[%s4 + $0x4] sm:$0xf] %v160
  %v165 = vunpack.c.l.bf16 %v155
  %v166 = vunpack.c.h.bf16 %v155
  %v167 = vadd.f32 %v165, %v166
  %v168 = vrot.slane %v167, 4
  %v169 = vadd.f32 %v167, %v168
  %v170 = vrot.slane %v169, 2
  %v171 = vadd.f32 %v169, %v170
  %v172 = vrot.slane %v171, 1
  %v173 = vadd.f32 %v171, %v172
  %v174 = vmul.f32 %v173, 0.0625
  %v175 = vsub.f32 %v165, %v174
  %v176 = vsub.f32 %v166, %v174
  %177 = vst [vmem:[%s5] sm:$0x1] %v173
  %v178 = vmul.f32 %v175, %v175
  %v179 = vmul.f32 %v176, %v176
  %v180 = vadd.f32 %v178, %v179
  %v181 = vrot.slane %v180, 4
  %v182 = vadd.f32 %v180, %v181
  %v183 = vrot.slane %v182, 2
  %v184 = vadd.f32 %v182, %v183
  %v185 = vrot.slane %v184, 1
  %v186 = vadd.f32 %v184, %v185
  %187 = vst [vmem:[%s6] sm:$0x1] %v186
  %p188 = scmp.eq.s32.totalorder 0, 0
  // Predicated region
  $region18: #{mlp_forward.4} parent=0 // pred_check
    %p189 = pneg %p188
  $region19: #{mlp_forward.4} parent=0 // pred_check_branch
    %191 = sbr.rel (%p189) target = $region21
  $region20: #{mlp_forward.4} parent=0 // pred_region
    %v192 = vlaneseq
    %v193 = vshrl.u32 %v192, 7
    %v194 = vadd.s32 %v193, 8
    %vm195 = vcmp.lt.s32.totalorder %v193, 8
    %vm196 = vcmp.lt.s32.totalorder %v194, 8
    %v197 = vsel %vm195, 1, 0
    %v198 = vsel %vm196, 1, 0
    %vm199 = vcmp.eq.s32.totalorder %v197, 1
    %vm200 = vcmp.eq.s32.totalorder %v198, 1
    %v201 = vsel %vm199, %v165, 0.0
    %v202 = vsel %vm200, %v166, 0.0
    %v203 = vadd.f32 %v201, %v202
    %v204 = vrot.slane %v203, 4
    %v205 = vadd.f32 %v203, %v204
    %v206 = vrot.slane %v205, 2
    %v207 = vadd.f32 %v205, %v206
    %v208 = vrot.slane %v207, 1
    %v209 = vadd.f32 %v207, %v208
    %v210 = vmul.f32 %v209, 0.125
    %v211 = vsub.f32 %v165, %v210
    %v212 = vsub.f32 %v166, %v210
    %v213 = vsel %vm199, %v211, 0.0
    %v214 = vsel %vm200, %v212, 0.0
    %215 = vst [vmem:[%s5] sm:$0x1] %v209
    %v216 = vmul.f32 %v213, %v213
    %v217 = vmul.f32 %v214, %v214
    %v218 = vadd.f32 %v216, %v217
    %v219 = vrot.slane %v218, 4
    %v220 = vadd.f32 %v218, %v219
    %v221 = vrot.slane %v220, 2
    %v222 = vadd.f32 %v220, %v221
    %v223 = vrot.slane %v222, 1
    %v224 = vadd.f32 %v222, %v223
    %225 = vst [vmem:[%s6] sm:$0x1] %v224
  $region21: #{mlp_forward.4} parent=0 // pred_fallthru
    _
  // Predicated region
  $region22: #{mlp_forward.4} parent=0 // pred_check
    _
  $region23: #{mlp_forward.4} parent=0 // pred_check_branch
    %227 = sbr.rel (0) target = $region25
  $region24: #{mlp_forward.4} parent=0 // pred_region
    _
  $region25: #{mlp_forward.4} parent=0 // pred_fallthru
    _
  // Predicated region
  $region26: #{mlp_forward.4} parent=0 // pred_check
    _
  $region27: #{mlp_forward.4} parent=0 // pred_check_branch
    %229 = sbr.rel (0) target = $region29
  $region28: #{mlp_forward.4} parent=0 // pred_region
    _
  $region29: #{mlp_forward.4} parent=0 // pred_fallthru
    _
  // Predicated region
  $region30: #{mlp_forward.4} parent=0 // pred_check
    _
  $region31: #{mlp_forward.4} parent=0 // pred_check_branch
    %231 = sbr.rel (0) target = $region33
  $region32: #{mlp_forward.4} parent=0 // pred_region
    _
  $region33: #{mlp_forward.4} parent=0 // pred_fallthru
    _
  // Predicated region
  $region34: #{mlp_forward.4} parent=0 // pred_check
    _
  $region35: #{mlp_forward.4} parent=0 // pred_check_branch
    %233 = sbr.rel (0) target = $region37
  $region36: #{mlp_forward.4} parent=0 // pred_region
    _
  $region37: #{mlp_forward.4} parent=0 // pred_fallthru
    _
  // Predicated region
  $region38: #{mlp_forward.4} parent=0 // pred_check
    _
  $region39: #{mlp_forward.4} parent=0 // pred_check_branch
    %235 = sbr.rel (0) target = $region41
  $region40: #{mlp_forward.4} parent=0 // pred_region
    _
  $region41: #{mlp_forward.4} parent=0 // pred_fallthru
    _
  // Predicated region
  $region42: #{mlp_forward.4} parent=0 // pred_check
    _
  $region43: #{mlp_forward.4} parent=0 // pred_check_branch
    %237 = sbr.rel (0) target = $region45
  $region44: #{mlp_forward.4} parent=0 // pred_region
    _
  $region45: #{mlp_forward.4} parent=0 // pred_fallthru
    _

</llo_original>
